<compile_context>
chip_gen: v6e
topology: v6e:2x2x1
jax: 0.10.0
libtpu: 0.0.40
codegen_flags: <defaults>
</compile_context>

<pallas_src>
import jax
import jax.numpy as jnp
from jax.experimental import pallas as pl
from jax.experimental.pallas import tpu as pltpu


# ----------------------------------- kernels -----------------------------------------------

def _conv1d_kernel(x_ref, w_ref, b_ref, o_ref):
    # Full-K tile: (tm, nx) @ (nx, tn) on the MXU with f32 accumulation, + bias, cast to half.
    acc = jnp.dot(x_ref[...], w_ref[...], preferred_element_type=jnp.float32)
    o_ref[...] = (acc + b_ref[...].astype(jnp.float32)).astype(o_ref.dtype)


def _conv1d_kernel_ktiled(x_ref, w_ref, b_ref, o_ref, acc_ref):
    # K-tiled variant: f32 accumulator scratch, init at k==0, finalize (bias + cast) at k==last.
    k = pl.program_id(2)

    @pl.when(k == 0)
    def _():
        acc_ref[...] = jnp.zeros_like(acc_ref)

    acc_ref[...] += jnp.dot(x_ref[...], w_ref[...], preferred_element_type=jnp.float32)

    @pl.when(k == pl.num_programs(2) - 1)
    def _():
        o_ref[...] = (acc_ref[...] + b_ref[...].astype(jnp.float32)).astype(o_ref.dtype)


# --------------------------------- tiling helpers -------------------------------------------

def _round_up(x, m):
    return ((x + m - 1) // m) * m


def _cdiv(a, b):
    return (a + b - 1) // b


def _vmem_limit_bytes():
    """Scoped VMEM limit: ~85% of this generation's per-core VMEM capacity."""
    try:
        cap = int(pltpu.get_tpu_info().vmem_capacity_bytes)
    except Exception:
        cap = 64 * 1024 * 1024  # conservative (valid on v7x as well as v5e/v6e)
    cap = min(cap, 128 * 1024 * 1024)
    return max(32 * 1024 * 1024, int(cap * 0.85))


def _footprint_bytes(tm, tn, tk, ktiled):
    """Estimated VMEM footprint: double-buffered bf16 x/w/out/bias tiles (+ f32 acc scratch)."""
    fp = 2 * 2 * (tm * tk + tk * tn + tm * tn) + 2 * 2 * tn
    if ktiled:
        fp += 4 * tm * tn
    return fp


def _select_tiling(m, nx, nf, tile_budget):
    """Pick (tm, tn, tk, ktiled) that fits the VMEM budget."""
    tm = min(512, _round_up(m, 16))           # 16: bf16 sublane packing
    n_m = _cdiv(m, tm)

    # tn candidates: full output width (always layout-legal) or 128/256-aligned strips.
    cands = []
    if nf <= 2048:
        cands.append(nf)
    for t in (2048, 1024, 512, 256, 128):
        if t < nf and t not in cands:
            cands.append(t)
    # Decode-like shapes (one M block): prefer >=2 N strips so both v7x cores get work.
    if n_m == 1 and nf >= 256:
        multi = [t for t in cands if _cdiv(nf, t) >= 2]
        cands = multi + [t for t in cands if t not in multi]

    # 1) Full-K tiles (no reduction grid axis) if they fit.
    for tn in cands:
        if _footprint_bytes(tm, tn, nx, False) <= tile_budget:
            return tm, tn, nx, False

    # 2) K tiling (v7x-sized VMEM / very large nx).  tk must divide nx exactly so the
    #    ragged-block padding never leaks into the reduction.
    for tn in cands:
        tk_hi = min(2048, (nx // 128) * 128)
        for tk in range(tk_hi, 127, -128):
            if nx % tk == 0 and _footprint_bytes(tm, tn, tk, True) <= tile_budget:
                return tm, tn, tk, True

    # 3) Last resort: shrink tm with full K (keeps correctness when nx has no 128-divisor).
    for tm_s in (256, 128, 64, 32, 16):
        if tm_s >= tm:
            continue
        for tn in cands:
            if _footprint_bytes(tm_s, tn, nx, False) <= tile_budget:
                return tm_s, tn, nx, False

    return tm, cands[-1], nx, False


# ------------------------------------ wrapper -----------------------------------------------

def fp16_conv1d(x, weight, bias, use_fp16=False, *, _tile_budget_bytes=None):
    """y = bias + x.reshape(-1, nx) @ weight, reshaped back; computed in bf16 on the MXU."""
    del use_fp16  # both branches use bf16 on TPU (see TODO at top of file)
    half = jnp.bfloat16

    # Only cast when needed: bf16-holding callers pay no extra HBM pass here.
    x = x if x.dtype == half else x.astype(half)
    w = weight if weight.dtype == half else weight.astype(half)
    b = bias if bias.dtype == half else bias.astype(half)

    *lead, nx = x.shape
    nf = w.shape[1]
    x2 = x.reshape(-1, nx)
    m = x2.shape[0]
    b2 = b.reshape(1, nf)

    vmem_limit = _vmem_limit_bytes()
    tile_budget = max(vmem_limit - (4 << 20), vmem_limit // 2)
    if _tile_budget_bytes is not None:          # test/debug knob: tile selection only
        tile_budget = int(_tile_budget_bytes)

    tm, tn, tk, ktiled = _select_tiling(m, nx, nf, tile_budget)
    n_m = _cdiv(m, tm)
    n_n = _cdiv(nf, tn)
    n_k = nx // tk if ktiled else 1

    # Grid ordering (traffic model):
    #   N-outer / M-inner -> weight strip resident, x re-read n_n times.
    #   M-outer / N-inner -> x row strip resident, weight re-read n_m times.
    n_outer = (m * nx * n_n + nx * nf) <= (m * nx + nx * nf * n_m)

    if ktiled:
        kernel = _conv1d_kernel_ktiled
        scratch = [pltpu.VMEM((tm, tn), jnp.float32)]
        dim_sem = ("parallel", "parallel", "arbitrary")
        if n_outer:
            grid = (n_n, n_m, n_k)
            x_map = lambda j, i, k: (i, k)
            w_map = lambda j, i, k: (k, j)
            b_map = lambda j, i, k: (0, j)
            o_map = lambda j, i, k: (i, j)
        else:
            grid = (n_m, n_n, n_k)
            x_map = lambda i, j, k: (i, k)
            w_map = lambda i, j, k: (k, j)
            b_map = lambda i, j, k: (0, j)
            o_map = lambda i, j, k: (i, j)
    else:
        kernel = _conv1d_kernel
        scratch = []
        dim_sem = ("parallel", "parallel")
        if n_outer:
            grid = (n_n, n_m)
            x_map = lambda j, i: (i, 0)
            w_map = lambda j, i: (0, j)
            b_map = lambda j, i: (0, j)
            o_map = lambda j, i: (i, j)
        else:
            grid = (n_m, n_n)
            x_map = lambda i, j: (i, 0)
            w_map = lambda i, j: (0, j)
            b_map = lambda i, j: (0, j)
            o_map = lambda i, j: (i, j)

    cost = pl.CostEstimate(
        flops=2 * m * nx * nf,
        transcendentals=0,
        bytes_accessed=2 * (m * nx + nx * nf + m * nf) + 2 * nf,
    )

    out = pl.pallas_call(
        kernel,
        out_shape=jax.ShapeDtypeStruct((m, nf), half),
        grid_spec=pltpu.PrefetchScalarGridSpec(
            num_scalar_prefetch=0,
            grid=grid,
            in_specs=[
                pl.BlockSpec((tm, tk), x_map),   # activation row tile
                pl.BlockSpec((tk, tn), w_map),   # weight column strip
                pl.BlockSpec((1, tn), b_map),    # bias strip as (1, tn)
            ],
            out_specs=pl.BlockSpec((tm, tn), o_map),
            scratch_shapes=scratch,
        ),
        compiler_params=pltpu.CompilerParams(
            dimension_semantics=dim_sem,
            vmem_limit_bytes=vmem_limit),
        cost_estimate=cost,
    )(x2, w, b2)

    return out.reshape(*lead, nf)


# ------------------------------------ reference / tests -------------------------------------

def _reference(x, weight, bias):
    half = jnp.bfloat16
    *lead, nx = x.shape
    nf = weight.shape[1]
    ref = (x.astype(half).reshape(-1, nx).astype(jnp.float32)
           @ weight.astype(half).astype(jnp.float32)
           + bias.astype(half).astype(jnp.float32)).astype(half)
    return ref.reshape(*lead, nf)


def _check(y, ref, shape, atol, rtol):
    assert y.shape == shape and y.dtype == jnp.bfloat16
    assert jnp.allclose(y.astype(jnp.float32), ref.astype(jnp.float32), atol=atol, rtol=rtol)


if __name__ == "__main__":
    key = jax.random.PRNGKey(0)
    k_x1, k_w1, k_x2, k_w2, k_x3, k_w3 = jax.random.split(key, 6)

    # --- (1) toy module shapes: batch=2, seq=8, nx=32, nf=64 (single tile, N-outer path) ----
    # Parameter init matches the module: weight ~ N(0, 0.02^2) of shape (nx, nf); bias zeros.
    b1, s1, nx1, nf1 = 2, 8, 32, 64
    w1 = 0.02 * jax.random.normal(k_w1, (nx1, nf1), dtype=jnp.float32)
    bias1 = jnp.zeros((nf1,), dtype=jnp.float32)
    x1 = jax.random.normal(k_x1, (b1, s1, nx1), dtype=jnp.float32)
    y1 = jax.block_until_ready(fp16_conv1d(x1, w1, bias1, use_fp16=False))
    _check(y1, _reference(x1, w1, bias1), (b1, s1, nf1), atol=1e-2, rtol=1e-2)

    # --- (2) ragged-M + multi-strip-N path: masked last block, no XLA-side pad/slice --------
    b2_, s2, nx2, nf2 = 3, 7, 256, 1024   # m = 21 (ragged inside a 32-row block)
    w2 = 0.02 * jax.random.normal(k_w2, (nx2, nf2), dtype=jnp.float32)
    bias2 = jnp.zeros((nf2,), dtype=jnp.float32)
    x2 = jax.random.normal(k_x2, (b2_, s2, nx2), dtype=jnp.float32)
    y2 = jax.block_until_ready(fp16_conv1d(x2, w2, bias2, use_fp16=False))
    _check(y2, _reference(x2, w2, bias2), (b2_, s2, nf2), atol=2e-2, rtol=2e-2)

    # --- (3) K-tiled (v7x-style) accumulator path, forced via the tile-budget knob ----------
    b3, s3, nx3, nf3 = 4, 24, 512, 384    # m = 96; small budget -> tn=256, tk=128, ragged N
    w3 = 0.02 * jax.random.normal(k_w3, (nx3, nf3), dtype=jnp.float32)
    bias3 = jnp.zeros((nf3,), dtype=jnp.float32)
    x3 = jax.random.normal(k_x3, (b3, s3, nx3), dtype=jnp.float32)
    y3 = jax.block_until_ready(
        fp16_conv1d(x3, w3, bias3, use_fp16=False, _tile_budget_bytes=400_000))
    _check(y3, _reference(x3, w3, bias3), (b3, s3, nf3), atol=2e-2, rtol=2e-2)

    print("KERNEL_OK")
</pallas_src>

<mosaic_0001>
module attributes {stable_mosaic.version = 11 : i64} {
  func.func @_conv1d_kernel(%arg0: i32, %arg1: i32, %arg2: memref<16x32xbf16, #tpu.memory_space<vmem>>, %arg3: memref<32x64xbf16, #tpu.memory_space<vmem>>, %arg4: memref<1x64xbf16, #tpu.memory_space<vmem>>, %arg5: memref<16x64xbf16, #tpu.memory_space<vmem>>) attributes {dimension_semantics = [#tpu.dimension_semantics<parallel>, #tpu.dimension_semantics<parallel>], iteration_bounds = array<i64: 1, 1>, scalar_prefetch = 0 : i64, scratch_operands = 0 : i64, tpu.core_type = #tpu.core_type<tc>, window_params = [{transform_indices = @transform_0, window_bounds = array<i64: 16, 32>}, {transform_indices = @transform_1, window_bounds = array<i64: 32, 64>}, {transform_indices = @transform_2, window_bounds = array<i64: 1, 64>}, {transform_indices = @transform_3, window_bounds = array<i64: 16, 64>}]} {
    %c0 = arith.constant 0 : index
    %c0_0 = arith.constant 0 : index
    %0 = vector.load %arg2[%c0, %c0_0] : memref<16x32xbf16, #tpu.memory_space<vmem>>, vector<16x32xbf16>
    %c0_1 = arith.constant 0 : index
    %c0_2 = arith.constant 0 : index
    %1 = vector.load %arg3[%c0_1, %c0_2] : memref<32x64xbf16, #tpu.memory_space<vmem>>, vector<32x64xbf16>
    %cst = arith.constant dense<0.000000e+00> : vector<16x64xf32>
    %2 = tpu.matmul %0, %1, %cst {dimension_numbers = #tpu.dot_dimension_numbers<[1], [0], [0], [1], [0, 0, 1, 1], [], []>} : vector<16x32xbf16>, vector<32x64xbf16>, vector<16x64xf32> -> vector<16x64xf32>
    %c0_3 = arith.constant 0 : index
    %c0_4 = arith.constant 0 : index
    %3 = vector.load %arg4[%c0_3, %c0_4] : memref<1x64xbf16, #tpu.memory_space<vmem>>, vector<1x64xbf16>
    %4 = arith.extf %3 : vector<1x64xbf16> to vector<1x64xf32>
    %5 = vector.broadcast %4 : vector<1x64xf32> to vector<16x64xf32>
    %6 = arith.addf %2, %5 : vector<16x64xf32>
    %7 = arith.truncf %6 : vector<16x64xf32> to vector<16x64xbf16>
    %c0_5 = arith.constant 0 : index
    %c0_6 = arith.constant 0 : index
    %8 = vector.load %arg5[%c0_5, %c0_6] : memref<16x64xbf16, #tpu.memory_space<vmem>>, vector<16x64xbf16>
    tpu.vector_store %arg5[%c0_5, %c0_6], %7 {strides = array<i32>} : memref<16x64xbf16, #tpu.memory_space<vmem>>, vector<16x64xbf16>,
    return
  }
  func.func @transform_0(%arg0: i32, %arg1: i32) -> (i32, i32) {
    %c0_i32 = arith.constant 0 : i32
    %c0_i32_0 = arith.constant 0 : i32
    return %arg1, %c0_i32 : i32, i32
  }
  func.func @transform_1(%arg0: i32, %arg1: i32) -> (i32, i32) {
    %c0_i32 = arith.constant 0 : i32
    %c0_i32_0 = arith.constant 0 : i32
    return %c0_i32, %arg0 : i32, i32
  }
  func.func @transform_2(%arg0: i32, %arg1: i32) -> (i32, i32) {
    %c0_i32 = arith.constant 0 : i32
    %c0_i32_0 = arith.constant 0 : i32
    return %c0_i32, %arg0 : i32, i32
  }
  func.func @transform_3(%arg0: i32, %arg1: i32) -> (i32, i32) {
    %c0_i32 = arith.constant 0 : i32
    return %arg1, %arg0 : i32, i32
  }
}

</mosaic_0001>

<llo_original>
// kernel: tpu_custom_call.1
$region0: #{tpu_custom_call.1}
  #allocation0 [shape = 'u32[]', space=smem, size = 0x4, offset = 0x4, fixed_abs, tag = 'smem constant byte address 0x4 - core index']
  #allocation1 [shape = 'u32[144,128]{1,0:T(1,128)}', space=vmem, size = 0x12000, scoped, tag = 'internal scratch']
  %s0 = inlined_call_operand.hbm [shape: bf16[16,32], index: 0, kind: input, shape index: {}]
  %s1 = inlined_call_operand.hbm [shape: bf16[32,64], index: 1, kind: input, shape index: {}]
  %s2 = inlined_call_operand.vmem [shape: bf16[1,64], index: 2, kind: input, shape index: {}]
  %s3 = inlined_call_operand.hbm [shape: bf16[16,64], index: 3, kind: output, shape index: {}]
  %s4 = sld [smem:[#allocation0]]
  $region30: #{tpu_custom_call.1} parent=0
    _
  %s6 = ssub.s32 1, %s4
  %s7 = scalar_select 0, %s6, %s4
  $region1: #{tpu_custom_call.1} parent=0
    #allocation2 [shape = 'u8[4096]{0}', space=vmem, size = 0x1000, scoped, tag = 'input window, operand 0, single buffered']
    #allocation3 [shape = 's32[1]{0}', space=sflag, size = 0x4, scoped, tag = 'scoped memory for tpu_custom_call.1']
    #allocation4 [shape = 's32[1]{0}', space=sflag, size = 0x4, scoped, tag = 'scoped memory for tpu_custom_call.1']
    #allocation5 [shape = 'u8[8192]{0}', space=vmem, size = 0x2000, scoped, tag = 'input window, operand 1, single buffered']
    #allocation6 [shape = 's32[1]{0}', space=sflag, size = 0x4, scoped, tag = 'scoped memory for tpu_custom_call.1']
    #allocation7 [shape = 'u8[4096]{0}', space=vmem, size = 0x1000, scoped, tag = 'output window, operand 0, single buffered']
    %8 = vsyncpa [#allocation3], 0
    %9 = vsyncpa [#allocation6], 0
    %10 = vsyncpa [#allocation4], 0
    // Predicated region
    $region2: #{tpu_custom_call.1} parent=1 // pred_check
      _
    $region3: #{tpu_custom_call.1} parent=1 // pred_check_branch
      %12 = sbr.rel (0) target = $region5
    $region4: #{tpu_custom_call.1} parent=1 // pred_region
      %s14 = ssub.s32 128, 128
      %15 = vsyncadd [#allocation3], %s14
      %s16 = sshll.u32 [#allocation2], 4
      %s17 = int_to_ptr.vmem [resolvable:$true] %s16
      %22 = dma.hbm_to_vmem [thread:$0]  %s0, 128, %s17, [#allocation3], 64, 64, 4
    $region5: #{tpu_custom_call.1} parent=1 // pred_fallthru
      _
    // Predicated region
    $region6: #{tpu_custom_call.1} parent=1 // pred_check
      _
    $region7: #{tpu_custom_call.1} parent=1 // pred_check_branch
      %24 = sbr.rel (0) target = $region9
    $region8: #{tpu_custom_call.1} parent=1 // pred_region
      %s26 = ssub.s32 256, 256
      %27 = vsyncadd [#allocation6], %s26
      %s28 = sshll.u32 [#allocation5], 4
      %s29 = int_to_ptr.vmem [resolvable:$true] %s28
      %34 = dma.hbm_to_vmem [thread:$0]  %s1, 256, %s29, [#allocation6], 64, 64, 4
    $region9: #{tpu_custom_call.1} parent=1 // pred_fallthru
      _
    // Predicated region
    $region10: #{tpu_custom_call.1} parent=1 // pred_check
      _
    $region11: #{tpu_custom_call.1} parent=1 // pred_check_branch
      %36 = sbr.rel (0) target = $region13
    $region12: #{tpu_custom_call.1} parent=1 // pred_region
      _
    $region13: #{tpu_custom_call.1} parent=1 // pred_fallthru
      _
    // Predicated region
    $region14: #{tpu_custom_call.1} parent=1 // pred_check
      _
    $region15: #{tpu_custom_call.1} parent=1 // pred_check_branch
      %38 = sbr.rel (0) target = $region17
    $region16: #{tpu_custom_call.1} parent=1 // pred_region
      %39 = dma.done [#allocation3], 128
    $region17: #{tpu_custom_call.1} parent=1 // pred_fallthru
      _
    // Predicated region
    $region18: #{tpu_custom_call.1} parent=1 // pred_check
      _
    $region19: #{tpu_custom_call.1} parent=1 // pred_check_branch
      %41 = sbr.rel (0) target = $region21
    $region20: #{tpu_custom_call.1} parent=1 // pred_region
      %42 = dma.done [#allocation6], 256
    $region21: #{tpu_custom_call.1} parent=1 // pred_fallthru
      _
    %v44 = vld [vmem:[#allocation2] sm:$0xf]
    %v45 = vld [vmem:[#allocation2 + $0x4] sm:$0xf]
    %v46 = vld [vmem:[#allocation5] sm:$0xf]
    %v47 = vld [vmem:[#allocation5 + $0x4] sm:$0xf]
    %v48 = vld [vmem:[#allocation5 + $0x8] sm:$0xf]
    %v49 = vld [vmem:[#allocation5 + $0xc] sm:$0xf]
    %v50 = vld [vmem:[%s2] sm:$0x1]
    %v51 = vunpack.c.l.bf16 %v50
    %v52 = vlaneseq
    %v53 = vshrl.u32 %v52, 7
    %v54 = vsub.s32 0, %v53
    %v55 = vrot.slane %v51, %v54
    %v58 = vunpack.c.l.b16 %v44
    %v59 = vunpack.c.l.b16 %v45
    %v60 = vpack.c.b16 %v59, %v58
    %v65 = vunpack.c.l.b16 %v46
    %v66 = vunpack.c.l.b16 %v47
    %v67 = vunpack.c.l.b16 %v48
    %v68 = vunpack.c.l.b16 %v49
    %v69 = vpack.c.b16 %v66, %v65
    %v70 = vpack.c.b16 %v68, %v67
    %vm73 = vcmask 261120
    %v75 = vsel %vm73, %v60, 0
    %77 = vmatprep.subr.bf16.mxu0 0
    %78 = vmatpush1.bf16.msra.mxu0 0
    %79 = vmatprep.subr.bf16.mxu0 0
    %80 = vmatpush1.bf16.msra.mxu0 0
    %81 = vmatprep.subr.bf16.mxu0 0
    %82 = vmatpush1.bf16.msra.mxu0 0
    %83 = vmatprep.subr.bf16.mxu0 0
    %84 = vmatpush1.bf16.msra.mxu0 0
    %85 = vmatprep.subr.bf16.mxu0 0
    %86 = vmatpush1.bf16.msra.mxu0 0
    %87 = vmatprep.subr.bf16.mxu0 0
    %88 = vmatpush1.bf16.msra.mxu0 0
    %89 = vmatprep.subr.bf16.mxu0 0
    %90 = vmatpush1.bf16.msra.mxu0 %v70
    %91 = vmatprep.subr.bf16.mxu0 0
    %92 = vmatpush1.bf16.msra.mxu0 %v69
    %93 = vmatprep.subr.bf16.mxu0 0
    %94 = vmatpush2.bf16.msra.mxu0 0
    %95 = vmatprep.subr.bf16.mxu0 0
    %96 = vmatpush2.bf16.msra.mxu0 0
    %97 = vmatprep.subr.bf16.mxu0 0
    %98 = vmatpush2.bf16.msra.mxu0 0
    %99 = vmatprep.subr.bf16.mxu0 0
    %100 = vmatpush2.bf16.msra.mxu0 0
    %101 = vmatprep.subr.bf16.mxu0 0
    %102 = vmatpush2.bf16.msra.mxu0 0
    %103 = vmatprep.subr.bf16.mxu0 0
    %104 = vmatpush2.bf16.msra.mxu0 0
    %105 = vmatprep.subr.bf16.mxu0 0
    %106 = vmatpush2.bf16.msra.mxu0 0
    %107 = vmatprep.subr.bf16.mxu0 0
    %108 = vmatpush2.bf16.msra.mxu0 0
    %109 = vmatprep.mubr.bf16.mxu0 0
    %110 = vmatmul.mubr.bf16.gmra.mxu0 %v75
    %v111 = vpop.f32.mrf.mxu0
    %v112 = vadd.f32 %v55, %v111
    %v113 = vpop.f32.mrf.mxu0
    %v114 = vpop.f32.mrf.mxu0
    %v115 = vadd.f32 %v55, %v114
    %v116 = vpop.f32.mrf.mxu0
    %117 = vdwg.mxu0
    %v118 = vpack.c.bf16 %v115, %v112
    %v120 = vunpack.c.l.b16 %v118
    %v121 = vunpack.c.h.b16 %v118
    %v122 = vpack.c.b16 %v120, %v120
    %v123 = vpack.c.b16 %v121, %v121
    %vm126 = vcmask 519168
    %127 = vst.msk [vmem:[#allocation7] sm:$0xf] %vm126, %v122
    %128 = vst.msk [vmem:[#allocation7 + $0x4] sm:$0xf] %vm126, %v123
    // Predicated region
    $region22: #{tpu_custom_call.1} parent=1 // pred_check
      _
    $region23: #{tpu_custom_call.1} parent=1 // pred_check_branch
      %130 = sbr.rel (0) target = $region25
    $region24: #{tpu_custom_call.1} parent=1 // pred_region
      %s132 = ssub.s32 128, 128
      %133 = vsyncadd [#allocation4], %s132
      %s134 = sshll.u32 [#allocation7], 4
      %s135 = int_to_ptr.vmem [resolvable:$true] %s134
      %140 = dma.vmem_to_hbm [thread:$0]  %s135, 128, %s3, [#allocation4], 64, 64, 4
    $region25: #{tpu_custom_call.1} parent=1 // pred_fallthru
      _
    // Predicated region
    $region26: #{tpu_custom_call.1} parent=1 // pred_check
      _
    $region27: #{tpu_custom_call.1} parent=1 // pred_check_branch
      %142 = sbr.rel (0) target = $region29
    $region28: #{tpu_custom_call.1} parent=1 // pred_region
      %143 = dma.done [#allocation4], 128
    $region29: #{tpu_custom_call.1} parent=1 // pred_fallthru
      _
    %144 = vsyncpa [#allocation3], 1
    %145 = vsyncpa [#allocation6], 1
    %146 = vsyncpa [#allocation4], 1

</llo_original>
